<compile_context>
chip_gen: v7x
topology: tpu7x:2x2x1
jax: 0.10.0
libtpu: 0.0.40
codegen_flags: <defaults>
</compile_context>

<pallas_src>
import math
import jax
import jax.numpy as jnp
from jax.experimental import pallas as pl
from jax.experimental.pallas import tpu as pltpu

HID = 128            # padded hidden width (lane-dense)
OUT_DIM = 128        # final layer width (already 128 in the PyTorch module)
MAX_BATCH_TILE = 1024


def _round_up(x, m):
    return ((x + m - 1) // m) * m


def twin_mlp_kernel(x1_ref, x2_ref,
                    w1_ref, b1_ref, w2_ref, b2_ref,
                    w3_ref, b3_ref, w4_ref, b4_ref,
                    o1_ref, o2_ref, xs_ref):
    """Shared MLP for both twin inputs, run ONCE on a row-stacked LHS."""
    tb = x1_ref.shape[0]              # rows per twin tile (static)
    tb_pad = xs_ref.shape[0] // 2     # sublane-aligned offset for the x2 rows

    # Stack the two twin tiles into one LHS so each 128x128 RHS is pushed into
    # the MXU once.  Pad rows (only present when tb < 8) are zeroed so they
    # never carry garbage; they are sliced away again on store.
    if tb != tb_pad:                  # static trace-time branch
        xs_ref[...] = jnp.zeros_like(xs_ref)
    xs_ref[0:tb, :] = x1_ref[...]
    xs_ref[tb_pad:tb_pad + tb, :] = x2_ref[...]

    h = xs_ref[...]                   # (2*tb_pad, F) f32

    # bf16 MXU matmuls with f32 accumulation; bias add / ReLU stay in f32
    # (v5e has no bf16 VPU path).  Zero-padded weight rows/cols + zero bias
    # lanes keep the padded math identical to the unpadded network.
    h = jnp.dot(h.astype(jnp.bfloat16), w1_ref[...],
                preferred_element_type=jnp.float32) + b1_ref[...]
    h = jnp.maximum(h, 0.0)
    h = jnp.dot(h.astype(jnp.bfloat16), w2_ref[...],
                preferred_element_type=jnp.float32) + b2_ref[...]
    h = jnp.maximum(h, 0.0)
    h = jnp.dot(h.astype(jnp.bfloat16), w3_ref[...],
                preferred_element_type=jnp.float32) + b3_ref[...]
    h = jnp.maximum(h, 0.0)
    out = jnp.dot(h.astype(jnp.bfloat16), w4_ref[...],
                  preferred_element_type=jnp.float32) + b4_ref[...]

    # Split the stacked rows back into the two twin outputs (static slices,
    # sublane-aligned start for the second half).
    o1_ref[...] = out[0:tb, :].astype(o1_ref.dtype)
    o2_ref[...] = out[tb_pad:tb_pad + tb, :].astype(o2_ref.dtype)


def twin_network_forward(x1, x2, padded_params, out_dtype=jnp.float32):
    """Exactly TwinNetwork.forward: the shared fc applied to both inputs.

    out_dtype=jnp.bfloat16 is available if downstream consumers tolerate it
    (halves output HBM writeback); default f32 matches the PyTorch module.
    """
    assert x1.shape == x2.shape and x1.ndim == 2
    B, F = x1.shape
    (w1, b1), (w2, b2), (w3, b3), (w4, b4) = padded_params

    # Batch tile.  Block == full dim is always legal for tiny B; otherwise keep
    # TB a multiple of 8 and make sure there are >= 2 grid steps for moderate
    # batches so a dual-TensorCore chip can split the "parallel" axis.
    if B <= 16:
        TB = B
    else:
        TB = min(MAX_BATCH_TILE, _round_up(pl.cdiv(B, 2), 8))
    nb = pl.cdiv(B, TB)
    TB_pad = _round_up(TB, 8)         # aligned offset of x2 rows in the stack

    x_spec = pl.BlockSpec((TB, F), lambda i: (i, 0))
    o_spec = pl.BlockSpec((TB, OUT_DIM), lambda i: (i, 0))
    # Constant block index -> weights/biases fetched once, VMEM-resident.
    const = lambda a: pl.BlockSpec(a.shape, lambda i: tuple(0 for _ in a.shape))

    flops = 2 * (2 * B) * (F * HID + 3 * HID * HID)
    out_bytes = 2 * B * OUT_DIM * jnp.dtype(out_dtype).itemsize
    bytes_accessed = (2 * B * F * 4 + out_bytes
                      + sum(w.size * w.dtype.itemsize + b.size * 4
                            for w, b in padded_params))
    cost = pl.CostEstimate(flops=flops, transcendentals=0,
                           bytes_accessed=bytes_accessed)

    # NOTE: when B % TB != 0 the last tile reads rows past B (harmless: no
    # cross-row reduction) and out-of-range output rows are masked on store.
    o1, o2 = pl.pallas_call(
        twin_mlp_kernel,
        out_shape=(jax.ShapeDtypeStruct((B, OUT_DIM), out_dtype),
                   jax.ShapeDtypeStruct((B, OUT_DIM), out_dtype)),
        grid=(nb,),
        in_specs=[x_spec, x_spec,
                  const(w1), const(b1), const(w2), const(b2),
                  const(w3), const(b3), const(w4), const(b4)],
        out_specs=[o_spec, o_spec],
        scratch_shapes=[pltpu.VMEM((2 * TB_pad, F), jnp.float32)],
        compiler_params=pltpu.CompilerParams(
            dimension_semantics=("parallel",)),
        cost_estimate=cost,
    )(x1, x2, w1, b1, w2, b2, w3, b3, w4, b4)
    return o1, o2


def init_params(key, feature_dim):
    """PyTorch-Linear-style init (uniform +-1/sqrt(fan_in)), stored (in, out)."""
    dims = [feature_dim, 8, 16, 8, OUT_DIM]
    params = []
    for i in range(4):
        key, kw, kb = jax.random.split(key, 3)
        fan_in, fan_out = dims[i], dims[i + 1]
        bound = 1.0 / math.sqrt(fan_in)
        w = jax.random.uniform(kw, (fan_in, fan_out), jnp.float32, -bound, bound)
        b = jax.random.uniform(kb, (1, fan_out), jnp.float32, -bound, bound)
        params.append((w, b))
    return params


def pad_params(params, feature_dim):
    """Zero-pad hidden dims 8/16/8 -> 128 lanes; cast weights to bf16.

    Zero rows/cols and zero bias entries make the padded network produce the
    same values in lanes [0, true_out) and exact zeros elsewhere (ReLU(0)=0),
    so results are unchanged apart from bf16 weight rounding.
    """
    true_in = [feature_dim, 8, 16, 8]
    true_out = [8, 16, 8, OUT_DIM]
    pad_in = [feature_dim, HID, HID, HID]
    pad_out = [HID, HID, HID, OUT_DIM]
    padded = []
    for (w, b), ti, to, pi, po in zip(params, true_in, true_out, pad_in, pad_out):
        wp = jnp.zeros((pi, po), jnp.float32).at[:ti, :to].set(w)
        bp = jnp.zeros((1, po), jnp.float32).at[:, :to].set(b)
        padded.append((wp.astype(jnp.bfloat16), bp))
    return padded


def _reference_f32(x, params):
    """Plain-JAX f32 reference on the original (unpadded) weights."""
    h = x
    for i, (w, b) in enumerate(params):
        h = h @ w + b
        if i < 3:
            h = jnp.maximum(h, 0.0)
    return h


def _reference_padded_bf16(x, padded_params):
    """Plain-JAX reference doing the identical padded/bf16 computation."""
    h = x
    for i, (w, b) in enumerate(padded_params):
        h = jnp.dot(h.astype(jnp.bfloat16), w,
                    preferred_element_type=jnp.float32) + b
        if i < 3:
            h = jnp.maximum(h, 0.0)
    return h


def _check(out1, out2, x1, x2, params, padded):
    r1 = _reference_padded_bf16(x1, padded)
    r2 = _reference_padded_bf16(x2, padded)
    assert jnp.allclose(out1, r1, atol=2e-3, rtol=2e-3)
    assert jnp.allclose(out2, r2, atol=2e-3, rtol=2e-3)
    f1 = _reference_f32(x1, params)
    f2 = _reference_f32(x2, params)
    assert float(jnp.max(jnp.abs(out1 - f1))) < 0.1
    assert float(jnp.max(jnp.abs(out2 - f2))) < 0.1


if __name__ == "__main__":
    key = jax.random.PRNGKey(0)
    feature_dim = 32

    kp, k1, k2, k3, k4 = jax.random.split(key, 5)
    params = init_params(kp, feature_dim)
    padded = pad_params(params, feature_dim)

    # Small case (matches the module's typical tiny twin batch): B=2.
    x1 = jax.random.normal(k1, (2, feature_dim), jnp.float32)
    x2 = jax.random.normal(k2, (2, feature_dim), jnp.float32)
    out1, out2 = twin_network_forward(x1, x2, padded)
    jax.block_until_ready((out1, out2))
    assert out1.shape == (2, OUT_DIM) and out2.shape == (2, OUT_DIM)
    _check(out1, out2, x1, x2, params, padded)

    # Moderate batch: exercises the aligned stacked path and the >=2-tile grid.
    x1b = jax.random.normal(k3, (48, feature_dim), jnp.float32)
    x2b = jax.random.normal(k4, (48, feature_dim), jnp.float32)
    out1b, out2b = twin_network_forward(x1b, x2b, padded)
    jax.block_until_ready((out1b, out2b))
    assert out1b.shape == (48, OUT_DIM) and out2b.shape == (48, OUT_DIM)
    _check(out1b, out2b, x1b, x2b, params, padded)

    print("KERNEL_OK")
</pallas_src>

<mosaic_0001>
module attributes {stable_mosaic.version = 11 : i64} {
  func.func @twin_mlp_kernel(%arg0: i32, %arg1: memref<2x32xf32, #tpu.memory_space<vmem>>, %arg2: memref<2x32xf32, #tpu.memory_space<vmem>>, %arg3: memref<32x128xbf16, #tpu.memory_space<vmem>>, %arg4: memref<1x128xf32, #tpu.memory_space<vmem>>, %arg5: memref<128x128xbf16, #tpu.memory_space<vmem>>, %arg6: memref<1x128xf32, #tpu.memory_space<vmem>>, %arg7: memref<128x128xbf16, #tpu.memory_space<vmem>>, %arg8: memref<1x128xf32, #tpu.memory_space<vmem>>, %arg9: memref<128x128xbf16, #tpu.memory_space<vmem>>, %arg10: memref<1x128xf32, #tpu.memory_space<vmem>>, %arg11: memref<2x128xf32, #tpu.memory_space<vmem>>, %arg12: memref<2x128xf32, #tpu.memory_space<vmem>>, %arg13: memref<16x32xf32, #tpu.memory_space<vmem>>) attributes {dimension_semantics = [#tpu.dimension_semantics<parallel>], iteration_bounds = array<i64: 1>, scalar_prefetch = 0 : i64, scratch_operands = 1 : i64, tpu.core_type = #tpu.core_type<tc>, window_params = [{transform_indices = @transform_0, window_bounds = array<i64: 2, 32>}, {transform_indices = @transform_1, window_bounds = array<i64: 2, 32>}, {pipeline_mode = #tpu.pipeline_mode<synchronous>, transform_indices = @transform_2, window_bounds = array<i64: 32, 128>}, {pipeline_mode = #tpu.pipeline_mode<synchronous>, transform_indices = @transform_3, window_bounds = array<i64: 1, 128>}, {pipeline_mode = #tpu.pipeline_mode<synchronous>, transform_indices = @transform_4, window_bounds = array<i64: 128, 128>}, {pipeline_mode = #tpu.pipeline_mode<synchronous>, transform_indices = @transform_5, window_bounds = array<i64: 1, 128>}, {pipeline_mode = #tpu.pipeline_mode<synchronous>, transform_indices = @transform_6, window_bounds = array<i64: 128, 128>}, {pipeline_mode = #tpu.pipeline_mode<synchronous>, transform_indices = @transform_7, window_bounds = array<i64: 1, 128>}, {pipeline_mode = #tpu.pipeline_mode<synchronous>, transform_indices = @transform_8, window_bounds = array<i64: 128, 128>}, {pipeline_mode = #tpu.pipeline_mode<synchronous>, transform_indices = @transform_9, window_bounds = array<i64: 1, 128>}, {transform_indices = @transform_10, window_bounds = array<i64: 2, 128>}, {transform_indices = @transform_11, window_bounds = array<i64: 2, 128>}]} {
    %cst = arith.constant 0.000000e+00 : f32
    %0 = vector.broadcast %cst : f32 to vector<16x32xf32>
    %c0 = arith.constant 0 : index
    %c0_0 = arith.constant 0 : index
    %1 = vector.load %arg13[%c0, %c0_0] : memref<16x32xf32, #tpu.memory_space<vmem>>, vector<16x32xf32>
    tpu.vector_store %arg13[%c0, %c0_0], %0 {strides = array<i32>} : memref<16x32xf32, #tpu.memory_space<vmem>>, vector<16x32xf32>,
    %c0_1 = arith.constant 0 : index
    %c0_2 = arith.constant 0 : index
    %2 = vector.load %arg1[%c0_1, %c0_2] : memref<2x32xf32, #tpu.memory_space<vmem>>, vector<2x32xf32>
    %c0_3 = arith.constant 0 : index
    %c0_4 = arith.constant 0 : index
    %3 = vector.load %arg13[%c0_3, %c0_4] : memref<16x32xf32, #tpu.memory_space<vmem>>, vector<2x32xf32>
    tpu.vector_store %arg13[%c0_3, %c0_4], %2 {strides = array<i32>} : memref<16x32xf32, #tpu.memory_space<vmem>>, vector<2x32xf32>,
    %c0_5 = arith.constant 0 : index
    %c0_6 = arith.constant 0 : index
    %4 = vector.load %arg2[%c0_5, %c0_6] : memref<2x32xf32, #tpu.memory_space<vmem>>, vector<2x32xf32>
    %c8 = arith.constant 8 : index
    %c0_7 = arith.constant 0 : index
    %5 = vector.load %arg13[%c8, %c0_7] : memref<16x32xf32, #tpu.memory_space<vmem>>, vector<2x32xf32>
    tpu.vector_store %arg13[%c8, %c0_7], %4 {strides = array<i32>} : memref<16x32xf32, #tpu.memory_space<vmem>>, vector<2x32xf32>,
    %c0_8 = arith.constant 0 : index
    %c0_9 = arith.constant 0 : index
    %6 = vector.load %arg13[%c0_8, %c0_9] : memref<16x32xf32, #tpu.memory_space<vmem>>, vector<16x32xf32>
    %7 = arith.truncf %6 : vector<16x32xf32> to vector<16x32xbf16>
    %c0_10 = arith.constant 0 : index
    %c0_11 = arith.constant 0 : index
    %8 = vector.load %arg3[%c0_10, %c0_11] : memref<32x128xbf16, #tpu.memory_space<vmem>>, vector<32x128xbf16>
    %cst_12 = arith.constant dense<0.000000e+00> : vector<16x128xf32>
    %9 = tpu.matmul %7, %8, %cst_12 {dimension_numbers = #tpu.dot_dimension_numbers<[1], [0], [0], [1], [0, 0, 1, 1], [], []>} : vector<16x32xbf16>, vector<32x128xbf16>, vector<16x128xf32> -> vector<16x128xf32>
    %c0_13 = arith.constant 0 : index
    %c0_14 = arith.constant 0 : index
    %10 = vector.load %arg4[%c0_13, %c0_14] : memref<1x128xf32, #tpu.memory_space<vmem>>, vector<1x128xf32>
    %11 = vector.broadcast %10 : vector<1x128xf32> to vector<16x128xf32>
    %12 = arith.addf %9, %11 : vector<16x128xf32>
    %cst_15 = arith.constant 0.000000e+00 : f32
    %13 = vector.broadcast %cst_15 : f32 to vector<16x128xf32>
    %14 = arith.maximumf %12, %13 : vector<16x128xf32>
    %15 = arith.truncf %14 : vector<16x128xf32> to vector<16x128xbf16>
    %c0_16 = arith.constant 0 : index
    %c0_17 = arith.constant 0 : index
    %16 = vector.load %arg5[%c0_16, %c0_17] : memref<128x128xbf16, #tpu.memory_space<vmem>>, vector<128x128xbf16>
    %cst_18 = arith.constant dense<0.000000e+00> : vector<16x128xf32>
    %17 = tpu.matmul %15, %16, %cst_18 {dimension_numbers = #tpu.dot_dimension_numbers<[1], [0], [0], [1], [0, 0, 1, 1], [], []>} : vector<16x128xbf16>, vector<128x128xbf16>, vector<16x128xf32> -> vector<16x128xf32>
    %c0_19 = arith.constant 0 : index
    %c0_20 = arith.constant 0 : index
    %18 = vector.load %arg6[%c0_19, %c0_20] : memref<1x128xf32, #tpu.memory_space<vmem>>, vector<1x128xf32>
    %19 = vector.broadcast %18 : vector<1x128xf32> to vector<16x128xf32>
    %20 = arith.addf %17, %19 : vector<16x128xf32>
    %cst_21 = arith.constant 0.000000e+00 : f32
    %21 = vector.broadcast %cst_21 : f32 to vector<16x128xf32>
    %22 = arith.maximumf %20, %21 : vector<16x128xf32>
    %23 = arith.truncf %22 : vector<16x128xf32> to vector<16x128xbf16>
    %c0_22 = arith.constant 0 : index
    %c0_23 = arith.constant 0 : index
    %24 = vector.load %arg7[%c0_22, %c0_23] : memref<128x128xbf16, #tpu.memory_space<vmem>>, vector<128x128xbf16>
    %cst_24 = arith.constant dense<0.000000e+00> : vector<16x128xf32>
    %25 = tpu.matmul %23, %24, %cst_24 {dimension_numbers = #tpu.dot_dimension_numbers<[1], [0], [0], [1], [0, 0, 1, 1], [], []>} : vector<16x128xbf16>, vector<128x128xbf16>, vector<16x128xf32> -> vector<16x128xf32>
    %c0_25 = arith.constant 0 : index
    %c0_26 = arith.constant 0 : index
    %26 = vector.load %arg8[%c0_25, %c0_26] : memref<1x128xf32, #tpu.memory_space<vmem>>, vector<1x128xf32>
    %27 = vector.broadcast %26 : vector<1x128xf32> to vector<16x128xf32>
    %28 = arith.addf %25, %27 : vector<16x128xf32>
    %cst_27 = arith.constant 0.000000e+00 : f32
    %29 = vector.broadcast %cst_27 : f32 to vector<16x128xf32>
    %30 = arith.maximumf %28, %29 : vector<16x128xf32>
    %31 = arith.truncf %30 : vector<16x128xf32> to vector<16x128xbf16>
    %c0_28 = arith.constant 0 : index
    %c0_29 = arith.constant 0 : index
    %32 = vector.load %arg9[%c0_28, %c0_29] : memref<128x128xbf16, #tpu.memory_space<vmem>>, vector<128x128xbf16>
    %cst_30 = arith.constant dense<0.000000e+00> : vector<16x128xf32>
    %33 = tpu.matmul %31, %32, %cst_30 {dimension_numbers = #tpu.dot_dimension_numbers<[1], [0], [0], [1], [0, 0, 1, 1], [], []>} : vector<16x128xbf16>, vector<128x128xbf16>, vector<16x128xf32> -> vector<16x128xf32>
    %c0_31 = arith.constant 0 : index
    %c0_32 = arith.constant 0 : index
    %34 = vector.load %arg10[%c0_31, %c0_32] : memref<1x128xf32, #tpu.memory_space<vmem>>, vector<1x128xf32>
    %35 = vector.broadcast %34 : vector<1x128xf32> to vector<16x128xf32>
    %36 = arith.addf %33, %35 : vector<16x128xf32>
    %37 = vector.extract_strided_slice %36 {offsets = [0, 0], sizes = [2, 128], strides = [1, 1]} : vector<16x128xf32> to vector<2x128xf32>
    %c0_33 = arith.constant 0 : index
    %c0_34 = arith.constant 0 : index
    %38 = vector.load %arg11[%c0_33, %c0_34] : memref<2x128xf32, #tpu.memory_space<vmem>>, vector<2x128xf32>
    tpu.vector_store %arg11[%c0_33, %c0_34], %37 {strides = array<i32>} : memref<2x128xf32, #tpu.memory_space<vmem>>, vector<2x128xf32>,
    %39 = vector.extract_strided_slice %36 {offsets = [8, 0], sizes = [2, 128], strides = [1, 1]} : vector<16x128xf32> to vector<2x128xf32>
    %c0_35 = arith.constant 0 : index
    %c0_36 = arith.constant 0 : index
    %40 = vector.load %arg12[%c0_35, %c0_36] : memref<2x128xf32, #tpu.memory_space<vmem>>, vector<2x128xf32>
    tpu.vector_store %arg12[%c0_35, %c0_36], %39 {strides = array<i32>} : memref<2x128xf32, #tpu.memory_space<vmem>>, vector<2x128xf32>,
    return
  }
  func.func @transform_0(%arg0: i32) -> (i32, i32) {
    %c0_i32 = arith.constant 0 : i32
    %c0_i32_0 = arith.constant 0 : i32
    return %arg0, %c0_i32 : i32, i32
  }
  func.func @transform_1(%arg0: i32) -> (i32, i32) {
    %c0_i32 = arith.constant 0 : i32
    %c0_i32_0 = arith.constant 0 : i32
    return %arg0, %c0_i32 : i32, i32
  }
  func.func @transform_2(%arg0: i32) -> (i32, i32) {
    %c0_i32 = arith.constant 0 : i32
    %c0_i32_0 = arith.constant 0 : i32
    %c0_i32_1 = arith.constant 0 : i32
    return %c0_i32, %c0_i32_0 : i32, i32
  }
  func.func @transform_3(%arg0: i32) -> (i32, i32) {
    %c0_i32 = arith.constant 0 : i32
    %c0_i32_0 = arith.constant 0 : i32
    %c0_i32_1 = arith.constant 0 : i32
    return %c0_i32, %c0_i32_0 : i32, i32
  }
  func.func @transform_4(%arg0: i32) -> (i32, i32) {
    %c0_i32 = arith.constant 0 : i32
    %c0_i32_0 = arith.constant 0 : i32
    %c0_i32_1 = arith.constant 0 : i32
    return %c0_i32, %c0_i32_0 : i32, i32
  }
  func.func @transform_5(%arg0: i32) -> (i32, i32) {
    %c0_i32 = arith.constant 0 : i32
    %c0_i32_0 = arith.constant 0 : i32
    %c0_i32_1 = arith.constant 0 : i32
    return %c0_i32, %c0_i32_0 : i32, i32
  }
  func.func @transform_6(%arg0: i32) -> (i32, i32) {
    %c0_i32 = arith.constant 0 : i32
    %c0_i32_0 = arith.constant 0 : i32
    %c0_i32_1 = arith.constant 0 : i32
    return %c0_i32, %c0_i32_0 : i32, i32
  }
  func.func @transform_7(%arg0: i32) -> (i32, i32) {
    %c0_i32 = arith.constant 0 : i32
    %c0_i32_0 = arith.constant 0 : i32
    %c0_i32_1 = arith.constant 0 : i32
    return %c0_i32, %c0_i32_0 : i32, i32
  }
  func.func @transform_8(%arg0: i32) -> (i32, i32) {
    %c0_i32 = arith.constant 0 : i32
    %c0_i32_0 = arith.constant 0 : i32
    %c0_i32_1 = arith.constant 0 : i32
    return %c0_i32, %c0_i32_0 : i32, i32
  }
  func.func @transform_9(%arg0: i32) -> (i32, i32) {
    %c0_i32 = arith.constant 0 : i32
    %c0_i32_0 = arith.constant 0 : i32
    %c0_i32_1 = arith.constant 0 : i32
    return %c0_i32, %c0_i32_0 : i32, i32
  }
  func.func @transform_10(%arg0: i32) -> (i32, i32) {
    %c0_i32 = arith.constant 0 : i32
    %c0_i32_0 = arith.constant 0 : i32
    return %arg0, %c0_i32 : i32, i32
  }
  func.func @transform_11(%arg0: i32) -> (i32, i32) {
    %c0_i32 = arith.constant 0 : i32
    %c0_i32_0 = arith.constant 0 : i32
    return %arg0, %c0_i32 : i32, i32
  }
}

</mosaic_0001>

<llo_original>
// kernel: tpu_custom_call.1
$region0: #{tpu_custom_call.1}
  #allocation0 [shape = 'u32[]', space=smem, size = 0x4, offset = 0x4, fixed_abs, tag = 'smem constant byte address 0x4 - core index']
  #allocation1 [shape = 'u32[144,128]{1,0:T(1,128)}', space=vmem, size = 0x12000, scoped, tag = 'internal scratch']
  #allocation2 [shape = 'f32[16,32]{1,0:T(8,128)}', space=vmem, size = 0x2000, scoped, tag = 'scratch operand']
  %s0 = inlined_call_operand.hbm [shape: f32[2,32], index: 0, kind: input, shape index: {}]
  %s1 = inlined_call_operand.vmem [shape: f32[2,32], index: 1, kind: input, shape index: {}]
  %s2 = inlined_call_operand.hbm [shape: bf16[32,128], index: 2, kind: input, shape index: {}]
  %s3 = inlined_call_operand.vmem [shape: f32[1,128], index: 3, kind: input, shape index: {}]
  %s4 = inlined_call_operand.hbm [shape: bf16[128,128], index: 4, kind: input, shape index: {}]
  %s5 = inlined_call_operand.vmem [shape: f32[1,128], index: 5, kind: input, shape index: {}]
  %s6 = inlined_call_operand.hbm [shape: bf16[128,128], index: 6, kind: input, shape index: {}]
  %s7 = inlined_call_operand.vmem [shape: f32[1,128], index: 7, kind: input, shape index: {}]
  %s8 = inlined_call_operand.hbm [shape: bf16[128,128], index: 8, kind: input, shape index: {}]
  %s9 = inlined_call_operand.vmem [shape: f32[1,128], index: 9, kind: input, shape index: {}]
  %s10 = inlined_call_operand.hbm [shape: f32[2,128], index: 10, kind: output, shape index: {0}]
  %s11 = inlined_call_operand.hbm [shape: f32[2,128], index: 11, kind: output, shape index: {1}]
  %12 = xla_tuple %s10, %s11
  %s13 = sld [smem:[#allocation0]]
  $region78: #{tpu_custom_call.1} parent=0
    _
  %s15 = ssub.s32 1, %s13
  %s16 = scalar_select 0, %s15, %s13
  $region1: #{tpu_custom_call.1} parent=0
    #allocation3 [shape = 'u8[1024]{0}', space=vmem, size = 0x400, scoped, tag = 'input window, operand 0, single buffered']
    #allocation4 [shape = 's32[1]{0}', space=sflag, size = 0x4, scoped, tag = 'scoped memory for tpu_custom_call.1']
    #allocation5 [shape = 's32[1]{0}', space=sflag, size = 0x4, scoped, tag = 'scoped memory for tpu_custom_call.1']
    #allocation6 [shape = 'u8[8192]{0}', space=vmem, size = 0x2000, scoped, tag = 'input window, operand 2, single buffered']
    #allocation7 [shape = 's32[1]{0}', space=sflag, size = 0x4, scoped, tag = 'scoped memory for tpu_custom_call.1']
    #allocation8 [shape = 'u8[32768]{0}', space=vmem, size = 0x8000, scoped, tag = 'input window, operand 4, single buffered']
    #allocation9 [shape = 'u8[32768]{0}', space=vmem, size = 0x8000, scoped, tag = 'input window, operand 6, single buffered']
    #allocation10 [shape = 's32[1]{0}', space=sflag, size = 0x4, scoped, tag = 'scoped memory for tpu_custom_call.1']
    #allocation11 [shape = 'u8[32768]{0}', space=vmem, size = 0x8000, scoped, tag = 'input window, operand 8, single buffered']
    #allocation12 [shape = 'u8[1024]{0}', space=vmem, size = 0x400, scoped, tag = 'output window, operand 0, single buffered']
    #allocation13 [shape = 'u8[1024]{0}', space=vmem, size = 0x400, scoped, tag = 'output window, operand 1, single buffered']
    #allocation14 [shape = 's32[1]{0}', space=sflag, size = 0x4, scoped, tag = 'scoped memory for tpu_custom_call.1']
    %17 = vsyncpa [#allocation4], 0
    %18 = vsyncpa [#allocation7], 0
    %19 = vsyncpa [#allocation10], 0
    %20 = vsyncpa [#allocation5], 0
    %21 = vsyncpa [#allocation14], 0
    // Predicated region
    $region2: #{tpu_custom_call.1} parent=1 // pred_check
      _
    $region3: #{tpu_custom_call.1} parent=1 // pred_check_branch
      %23 = sbr.rel (0) target = $region5
    $region4: #{tpu_custom_call.1} parent=1 // pred_region
      %s25 = ssub.s32 32, 32
      %26 = vsyncadd [#allocation4], %s25
      %s28 = sshll.u32 [#allocation3], 4
      %s29 = int_to_ptr.vmem [resolvable:$true] %s28
      %31 = dma.hbm_to_vmem [thread:$0]  %s0, 32, %s29, [#allocation4]
    $region5: #{tpu_custom_call.1} parent=1 // pred_fallthru
      _
    // Predicated region
    $region6: #{tpu_custom_call.1} parent=1 // pred_check
      _
    $region7: #{tpu_custom_call.1} parent=1 // pred_check_branch
      %33 = sbr.rel (0) target = $region9
    $region8: #{tpu_custom_call.1} parent=1 // pred_region
      _
    $region9: #{tpu_custom_call.1} parent=1 // pred_fallthru
      _
    // Predicated region
    $region10: #{tpu_custom_call.1} parent=1 // pred_check
      _
    $region11: #{tpu_custom_call.1} parent=1 // pred_check_branch
      %35 = sbr.rel (0) target = $region13
    $region12: #{tpu_custom_call.1} parent=1 // pred_region
      %s37 = ssub.s32 256, 256
      %38 = vsyncadd [#allocation7], %s37
      %s39 = sshll.u32 [#allocation6], 4
      %s40 = int_to_ptr.vmem [resolvable:$true] %s39
      %45 = dma.hbm_to_vmem [thread:$0]  %s2, 256, %s40, [#allocation7], 64, 64, 4
    $region13: #{tpu_custom_call.1} parent=1 // pred_fallthru
      _
    // Predicated region
    $region14: #{tpu_custom_call.1} parent=1 // pred_check
      _
    $region15: #{tpu_custom_call.1} parent=1 // pred_check_branch
      %47 = sbr.rel (0) target = $region17
    $region16: #{tpu_custom_call.1} parent=1 // pred_region
      _
    $region17: #{tpu_custom_call.1} parent=1 // pred_fallthru
      _
    // Predicated region
    $region18: #{tpu_custom_call.1} parent=1 // pred_check
      _
    $region19: #{tpu_custom_call.1} parent=1 // pred_check_branch
      %49 = sbr.rel (0) target = $region21
    $region20: #{tpu_custom_call.1} parent=1 // pred_region
      %s51 = ssub.s32 1024, 1024
      %52 = vsyncadd [#allocation7], %s51
      %s53 = sshll.u32 [#allocation8], 4
      %s54 = int_to_ptr.vmem [resolvable:$true] %s53
      %59 = dma.hbm_to_vmem [thread:$0]  %s4, 1024, %s54, [#allocation7], 64, 64, 4
    $region21: #{tpu_custom_call.1} parent=1 // pred_fallthru
      _
    // Predicated region
    $region22: #{tpu_custom_call.1} parent=1 // pred_check
      _
    $region23: #{tpu_custom_call.1} parent=1 // pred_check_branch
      %61 = sbr.rel (0) target = $region25
    $region24: #{tpu_custom_call.1} parent=1 // pred_region
      _
    $region25: #{tpu_custom_call.1} parent=1 // pred_fallthru
      _
    // Predicated region
    $region26: #{tpu_custom_call.1} parent=1 // pred_check
      _
    $region27: #{tpu_custom_call.1} parent=1 // pred_check_branch
      %63 = sbr.rel (0) target = $region29
    $region28: #{tpu_custom_call.1} parent=1 // pred_region
      %s65 = ssub.s32 1024, 1024
      %66 = vsyncadd [#allocation10], %s65
      %s67 = sshll.u32 [#allocation9], 4
      %s68 = int_to_ptr.vmem [resolvable:$true] %s67
      %73 = dma.hbm_to_vmem [thread:$0]  %s6, 1024, %s68, [#allocation10], 64, 64, 4
    $region29: #{tpu_custom_call.1} parent=1 // pred_fallthru
      _
    // Predicated region
    $region30: #{tpu_custom_call.1} parent=1 // pred_check
      _
    $region31: #{tpu_custom_call.1} parent=1 // pred_check_branch
      %75 = sbr.rel (0) target = $region33
    $region32: #{tpu_custom_call.1} parent=1 // pred_region
      _
    $region33: #{tpu_custom_call.1} parent=1 // pred_fallthru
      _
    // Predicated region
    $region34: #{tpu_custom_call.1} parent=1 // pred_check
      _
    $region35: #{tpu_custom_call.1} parent=1 // pred_check_branch
      %77 = sbr.rel (0) target = $region37
    $region36: #{tpu_custom_call.1} parent=1 // pred_region
      %s79 = ssub.s32 1024, 1024
      %80 = vsyncadd [#allocation10], %s79
      %s81 = sshll.u32 [#allocation11], 4
      %s82 = int_to_ptr.vmem [resolvable:$true] %s81
      %87 = dma.hbm_to_vmem [thread:$0]  %s8, 1024, %s82, [#allocation10], 64, 64, 4
    $region37: #{tpu_custom_call.1} parent=1 // pred_fallthru
      _
    // Predicated region
    $region38: #{tpu_custom_call.1} parent=1 // pred_check
      _
    $region39: #{tpu_custom_call.1} parent=1 // pred_check_branch
      %89 = sbr.rel (0) target = $region41
    $region40: #{tpu_custom_call.1} parent=1 // pred_region
      _
    $region41: #{tpu_custom_call.1} parent=1 // pred_fallthru
      _
    // Predicated region
    $region42: #{tpu_custom_call.1} parent=1 // pred_check
      _
    $region43: #{tpu_custom_call.1} parent=1 // pred_check_branch
      %91 = sbr.rel (0) target = $region45
    $region44: #{tpu_custom_call.1} parent=1 // pred_region
      %92 = dma.done [#allocation4], 32
    $region45: #{tpu_custom_call.1} parent=1 // pred_fallthru
      _
    // Predicated region
    $region46: #{tpu_custom_call.1} parent=1 // pred_check
      _
    $region47: #{tpu_custom_call.1} parent=1 // pred_check_branch
      %94 = sbr.rel (0) target = $region49
    $region48: #{tpu_custom_call.1} parent=1 // pred_region
      %95 = dma.done [#allocation7], 256
    $region49: #{tpu_custom_call.1} parent=1 // pred_fallthru
      _
    // Predicated region
    $region50: #{tpu_custom_call.1} parent=1 // pred_check
      _
    $region51: #{tpu_custom_call.1} parent=1 // pred_check_branch
      %97 = sbr.rel (0) target = $region53
    $region52: #{tpu_custom_call.1} parent=1 // pred_region
      %98 = dma.done [#allocation7], 1024
    $region53: #{tpu_custom_call.1} parent=1 // pred_fallthru
      _
    // Predicated region
    $region54: #{tpu_custom_call.1} parent=1 // pred_check
      _
    $region55: #{tpu_custom_call.1} parent=1 // pred_check_branch
      %100 = sbr.rel (0) target = $region57
    $region56: #{tpu_custom_call.1} parent=1 // pred_region
      %101 = dma.done [#allocation10], 1024
    $region57: #{tpu_custom_call.1} parent=1 // pred_fallthru
      _
    // Predicated region
    $region58: #{tpu_custom_call.1} parent=1 // pred_check
      _
    $region59: #{tpu_custom_call.1} parent=1 // pred_check_branch
      %103 = sbr.rel (0) target = $region61
    $region60: #{tpu_custom_call.1} parent=1 // pred_region
      %104 = dma.done [#allocation10], 1024
    $region61: #{tpu_custom_call.1} parent=1 // pred_fallthru
      _
    %vm106 = vcmask 261120
    %107 = vst.msk [vmem:[#allocation2] sm:$0xff] %vm106, 0.0
    %108 = vst.msk [vmem:[#allocation2 + $0x8] sm:$0xff] %vm106, 0.0
    %v109 = vld [vmem:[#allocation3] sm:$0x3]
    %vm110 = vcmask 254976
    %111 = vst.msk [vmem:[#allocation2] sm:$0x3] %vm110, %v109
    %v112 = vld [vmem:[%s1] sm:$0x3]
    %113 = vst.msk [vmem:[#allocation2 + $0x8] sm:$0x3] %vm110, %v112
    %v114 = vld [vmem:[#allocation2] sm:$0xff]
    %v115 = vld [vmem:[#allocation2 + $0x8] sm:$0xff]
    %v116 = vpack.c.bf16 %v115, %v114
    %v117 = vld [vmem:[#allocation6] sm:$0xf]
    %v118 = vld [vmem:[#allocation6 + $0x4] sm:$0xf]
    %v119 = vld [vmem:[#allocation6 + $0x8] sm:$0xf]
    %v120 = vld [vmem:[#allocation6 + $0xc] sm:$0xf]
    %v121 = vld [vmem:[%s3] sm:$0x1]
    %v123 = vlaneseq
    %v124 = vshrl.u32 %v123, 7
    %v125 = vsub.s32 0, %v124
    %v126 = vrot.slane %v121, %v125
    %v132 = vunpack.c.l.b16 %v117
    %v133 = vunpack.c.l.b16 %v118
    %v134 = vunpack.c.l.b16 %v119
    %v135 = vunpack.c.l.b16 %v120
    %v136 = vpack.c.b16 %v133, %v132
    %v137 = vpack.c.b16 %v135, %v134
    %v141 = vsel %vm106, %v116, 0
    %143 = vmatprep.subr.bf16.mxu0 0
    %144 = vmatpush1.bf16.msra.mxu0 %v136
    %145 = vmatprep.subr.bf16.mxu0 0
    %146 = vmatpush1.bf16.msra.mxu0 %v137
    %147 = vmatprep.subr.bf16.mxu0 0
    %148 = vmatpush1.bf16.msra.mxu0 0
    %149 = vmatprep.subr.bf16.mxu0 0
    %150 = vmatpush1.bf16.msra.mxu0 0
    %151 = vmatprep.subr.bf16.mxu0 0
    %152 = vmatpush1.bf16.msra.mxu0 0
    %153 = vmatprep.subr.bf16.mxu0 0
    %154 = vmatpush1.bf16.msra.mxu0 0
    %155 = vmatprep.subr.bf16.mxu0 0
    %156 = vmatpush1.bf16.msra.mxu0 0
    %157 = vmatprep.subr.bf16.mxu0 0
    %158 = vmatpush1.bf16.msra.mxu0 0
    %159 = vmatprep.subr.bf16.mxu0 0
    %160 = vmatpush1.bf16.msra.mxu0 0
    %161 = vmatprep.subr.bf16.mxu0 0
    %162 = vmatpush1.bf16.msra.mxu0 0
    %163 = vmatprep.subr.bf16.mxu0 0
    %164 = vmatpush1.bf16.msra.mxu0 0
    %165 = vmatprep.subr.bf16.mxu0 0
    %166 = vmatpush1.bf16.msra.mxu0 0
    %167 = vmatprep.subr.bf16.mxu0 0
    %168 = vmatpush1.bf16.msra.mxu0 0
    %169 = vmatprep.subr.bf16.mxu0 0
    %170 = vmatpush1.bf16.msra.mxu0 0
    %171 = vmatprep.subr.bf16.mxu0 0
    %172 = vmatpush1.bf16.msra.mxu0 0
    %173 = vmatprep.subr.bf16.mxu0 0
    %174 = vmatpush1.bf16.msra.mxu0 0
    %175 = vmatprep.mubr.bf16.mxu0 0
    %176 = vmatmul.mubr.bf16.gmra.mrb[0].mxu0 %v141
    %v177 = vpop.f32.mrb[0].mxu0
    %v178 = vadd.f32 %v126, %v177
    %v179 = vpop.f32.mrb[0].mxu0
    %v180 = vpop.f32.mrb[0].mxu0
    %v181 = vadd.f32 %v126, %v180
    %v182 = vpop.f32.mrb[0].mxu0
    %183 = vdwg.mxu0
    %v184 = vmax.f32 %v178, 0.0
    %v185 = vmax.f32 %v181, 0.0
    %v186 = vpack.c.bf16 %v185, %v184
    %v187 = vld [vmem:[#allocation8] sm:$0xf]
    %v188 = vld [vmem:[#allocation8 + $0x4] sm:$0xf]
    %v189 = vld [vmem:[#allocation8 + $0x8] sm:$0xf]
    %v190 = vld [vmem:[#allocation8 + $0xc] sm:$0xf]
    %v191 = vld [vmem:[#allocation8 + $0x10] sm:$0xf]
    %v192 = vld [vmem:[#allocation8 + $0x14] sm:$0xf]
    %v193 = vld [vmem:[#allocation8 + $0x18] sm:$0xf]
    %v194 = vld [vmem:[#allocation8 + $0x1c] sm:$0xf]
    %v195 = vld [vmem:[#allocation8 + $0x20] sm:$0xf]
    %v196 = vld [vmem:[#allocation8 + $0x24] sm:$0xf]
    %v197 = vld [vmem:[#allocation8 + $0x28] sm:$0xf]
    %v198 = vld [vmem:[#allocation8 + $0x2c] sm:$0xf]
    %v199 = vld [vmem:[#allocation8 + $0x30] sm:$0xf]
    %v200 = vld [vmem:[#allocation8 + $0x34] sm:$0xf]
    %v201 = vld [vmem:[#allocation8 + $0x38] sm:$0xf]
    %v202 = vld [vmem:[#allocation8 + $0x3c] sm:$0xf]
    %v203 = vld [vmem:[%s5] sm:$0x1]
    %v205 = vlaneseq
    %v206 = vshrl.u32 %v205, 7
    %v207 = vsub.s32 0, %v206
    %v208 = vrot.slane %v203, %v207
    %v226 = vunpack.c.l.b16 %v187
    %v227 = vunpack.c.l.b16 %v188
    %v228 = vunpack.c.l.b16 %v189
    %v229 = vunpack.c.l.b16 %v190
    %v230 = vunpack.c.l.b16 %v191
    %v231 = vunpack.c.l.b16 %v192
    %v232 = vunpack.c.l.b16 %v193
    %v233 = vunpack.c.l.b16 %v194
    %v234 = vunpack.c.l.b16 %v195
    %v235 = vunpack.c.l.b16 %v196
    %v236 = vunpack.c.l.b16 %v197
    %v237 = vunpack.c.l.b16 %v198
    %v238 = vunpack.c.l.b16 %v199
    %v239 = vunpack.c.l.b16 %v200
    %v240 = vunpack.c.l.b16 %v201
    %v241 = vunpack.c.l.b16 %v202
    %v242 = vpack.c.b16 %v227, %v226
    %v243 = vpack.c.b16 %v229, %v228
    %v244 = vpack.c.b16 %v231, %v230
    %v245 = vpack.c.b16 %v233, %v232
    %v246 = vpack.c.b16 %v235, %v234
    %v247 = vpack.c.b16 %v237, %v236
    %v248 = vpack.c.b16 %v239, %v238
    %v249 = vpack.c.b16 %v241, %v240
    %258 = vmatprep.subr.bf16.mxu0 0
    %259 = vmatpush1.bf16.msra.mxu0 %v242
    %260 = vmatprep.subr.bf16.mxu0 0
    %261 = vmatpush1.bf16.msra.mxu0 %v243
    %262 = vmatprep.subr.bf16.mxu0 0
    %263 = vmatpush1.bf16.msra.mxu0 %v244
    %264 = vmatprep.subr.bf16.mxu0 0
    %265 = vmatpush1.bf16.msra.mxu0 %v245
    %266 = vmatprep.subr.bf16.mxu0 0
    %267 = vmatpush1.bf16.msra.mxu0 %v246
    %268 = vmatprep.subr.bf16.mxu0 0
    %269 = vmatpush1.bf16.msra.mxu0 %v247
    %270 = vmatprep.subr.bf16.mxu0 0
    %271 = vmatpush1.bf16.msra.mxu0 %v248
    %272 = vmatprep.subr.bf16.mxu0 0
    %273 = vmatpush1.bf16.msra.mxu0 %v249
    %274 = vmatprep.subr.bf16.mxu0 0
    %275 = vmatpush1.bf16.msra.mxu0 0
    %276 = vmatprep.subr.bf16.mxu0 0
    %277 = vmatpush1.bf16.msra.mxu0 0
    %278 = vmatprep.subr.bf16.mxu0 0
    %279 = vmatpush1.bf16.msra.mxu0 0
    %280 = vmatprep.subr.bf16.mxu0 0
    %281 = vmatpush1.bf16.msra.mxu0 0
    %282 = vmatprep.subr.bf16.mxu0 0
    %283 = vmatpush1.bf16.msra.mxu0 0
    %284 = vmatprep.subr.bf16.mxu0 0
    %285 = vmatpush1.bf16.msra.mxu0 0
    %286 = vmatprep.subr.bf16.mxu0 0
    %287 = vmatpush1.bf16.msra.mxu0 0
    %288 = vmatprep.subr.bf16.mxu0 0
    %289 = vmatpush1.bf16.msra.mxu0 0
    %290 = vmatprep.mubr.bf16.mxu0 0
    %291 = vmatmul.mubr.bf16.gmra.mrb[0].mxu0 %v186
    %v292 = vpop.f32.mrb[0].mxu0
    %v293 = vadd.f32 %v208, %v292
    %v294 = vpop.f32.mrb[0].mxu0
    %v295 = vpop.f32.mrb[0].mxu0
    %v296 = vadd.f32 %v208, %v295
    %v297 = vpop.f32.mrb[0].mxu0
    %298 = vdwg.mxu0
    %v299 = vmax.f32 %v293, 0.0
    %v300 = vmax.f32 %v296, 0.0
    %v301 = vpack.c.bf16 %v300, %v299
    %v302 = vld [vmem:[#allocation9] sm:$0xf]
    %v303 = vld [vmem:[#allocation9 + $0x4] sm:$0xf]
    %v304 = vld [vmem:[#allocation9 + $0x8] sm:$0xf]
    %v305 = vld [vmem:[#allocation9 + $0xc] sm:$0xf]
    %v306 = vld [vmem:[#allocation9 + $0x10] sm:$0xf]
    %v307 = vld [vmem:[#allocation9 + $0x14] sm:$0xf]
    %v308 = vld [vmem:[#allocation9 + $0x18] sm:$0xf]
    %v309 = vld [vmem:[#allocation9 + $0x1c] sm:$0xf]
    %v310 = vld [vmem:[#allocation9 + $0x20] sm:$0xf]
    %v311 = vld [vmem:[#allocation9 + $0x24] sm:$0xf]
    %v312 = vld [vmem:[#allocation9 + $0x28] sm:$0xf]
    %v313 = vld [vmem:[#allocation9 + $0x2c] sm:$0xf]
    %v314 = vld [vmem:[#allocation9 + $0x30] sm:$0xf]
    %v315 = vld [vmem:[#allocation9 + $0x34] sm:$0xf]
    %v316 = vld [vmem:[#allocation9 + $0x38] sm:$0xf]
    %v317 = vld [vmem:[#allocation9 + $0x3c] sm:$0xf]
    %v318 = vld [vmem:[%s7] sm:$0x1]
    %v320 = vlaneseq
    %v321 = vshrl.u32 %v320, 7
    %v322 = vsub.s32 0, %v321
    %v323 = vrot.slane %v318, %v322
    %v341 = vunpack.c.l.b16 %v302
    %v342 = vunpack.c.l.b16 %v303
    %v343 = vunpack.c.l.b16 %v304
    %v344 = vunpack.c.l.b16 %v305
    %v345 = vunpack.c.l.b16 %v306
    %v346 = vunpack.c.l.b16 %v307
    %v347 = vunpack.c.l.b16 %v308
    %v348 = vunpack.c.l.b16 %v309
    %v349 = vunpack.c.l.b16 %v310
    %v350 = vunpack.c.l.b16 %v311
    %v351 = vunpack.c.l.b16 %v312
    %v352 = vunpack.c.l.b16 %v313
    %v353 = vunpack.c.l.b16 %v314
    %v354 = vunpack.c.l.b16 %v315
    %v355 = vunpack.c.l.b16 %v316
    %v356 = vunpack.c.l.b16 %v317
    %v357 = vpack.c.b16 %v342, %v341
    %v358 = vpack.c.b16 %v344, %v343
    %v359 = vpack.c.b16 %v346, %v345
    %v360 = vpack.c.b16 %v348, %v347
    %v361 = vpack.c.b16 %v350, %v349
    %v362 = vpack.c.b16 %v352, %v351
    %v363 = vpack.c.b16 %v354, %v353
    %v364 = vpack.c.b16 %v356, %v355
    %373 = vmatprep.subr.bf16.mxu0 0
    %374 = vmatpush1.bf16.msra.mxu0 %v357
    %375 = vmatprep.subr.bf16.mxu0 0
    %376 = vmatpush1.bf16.msra.mxu0 %v358
    %377 = vmatprep.subr.bf16.mxu0 0
    %378 = vmatpush1.bf16.msra.mxu0 %v359
    %379 = vmatprep.subr.bf16.mxu0 0
    %380 = vmatpush1.bf16.msra.mxu0 %v360
    %381 = vmatprep.subr.bf16.mxu0 0
    %382 = vmatpush1.bf16.msra.mxu0 %v361
    %383 = vmatprep.subr.bf16.mxu0 0
    %384 = vmatpush1.bf16.msra.mxu0 %v362
    %385 = vmatprep.subr.bf16.mxu0 0
    %386 = vmatpush1.bf16.msra.mxu0 %v363
    %387 = vmatprep.subr.bf16.mxu0 0
    %388 = vmatpush1.bf16.msra.mxu0 %v364
    %389 = vmatprep.subr.bf16.mxu0 0
    %390 = vmatpush1.bf16.msra.mxu0 0
    %391 = vmatprep.subr.bf16.mxu0 0
    %392 = vmatpush1.bf16.msra.mxu0 0
    %393 = vmatprep.subr.bf16.mxu0 0
    %394 = vmatpush1.bf16.msra.mxu0 0
    %395 = vmatprep.subr.bf16.mxu0 0
    %396 = vmatpush1.bf16.msra.mxu0 0
    %397 = vmatprep.subr.bf16.mxu0 0
    %398 = vmatpush1.bf16.msra.mxu0 0
    %399 = vmatprep.subr.bf16.mxu0 0
    %400 = vmatpush1.bf16.msra.mxu0 0
    %401 = vmatprep.subr.bf16.mxu0 0
    %402 = vmatpush1.bf16.msra.mxu0 0
    %403 = vmatprep.subr.bf16.mxu0 0
    %404 = vmatpush1.bf16.msra.mxu0 0
    %405 = vmatprep.mubr.bf16.mxu0 0
    %406 = vmatmul.mubr.bf16.gmra.mrb[0].mxu0 %v301
    %v407 = vpop.f32.mrb[0].mxu0
    %v408 = vadd.f32 %v323, %v407
    %v409 = vpop.f32.mrb[0].mxu0
    %v410 = vpop.f32.mrb[0].mxu0
    %v411 = vadd.f32 %v323, %v410
    %v412 = vpop.f32.mrb[0].mxu0
    %413 = vdwg.mxu0
    %v414 = vmax.f32 %v408, 0.0
    %v415 = vmax.f32 %v411, 0.0
    %v416 = vpack.c.bf16 %v415, %v414
    %v417 = vld [vmem:[#allocation11] sm:$0xf]
    %v418 = vld [vmem:[#allocation11 + $0x4] sm:$0xf]
    %v419 = vld [vmem:[#allocation11 + $0x8] sm:$0xf]
    %v420 = vld [vmem:[#allocation11 + $0xc] sm:$0xf]
    %v421 = vld [vmem:[#allocation11 + $0x10] sm:$0xf]
    %v422 = vld [vmem:[#allocation11 + $0x14] sm:$0xf]
    %v423 = vld [vmem:[#allocation11 + $0x18] sm:$0xf]
    %v424 = vld [vmem:[#allocation11 + $0x1c] sm:$0xf]
    %v425 = vld [vmem:[#allocation11 + $0x20] sm:$0xf]
    %v426 = vld [vmem:[#allocation11 + $0x24] sm:$0xf]
    %v427 = vld [vmem:[#allocation11 + $0x28] sm:$0xf]
    %v428 = vld [vmem:[#allocation11 + $0x2c] sm:$0xf]
    %v429 = vld [vmem:[#allocation11 + $0x30] sm:$0xf]
    %v430 = vld [vmem:[#allocation11 + $0x34] sm:$0xf]
    %v431 = vld [vmem:[#allocation11 + $0x38] sm:$0xf]
    %v432 = vld [vmem:[#allocation11 + $0x3c] sm:$0xf]
    %v433 = vld [vmem:[%s9] sm:$0x1]
    %v435 = vlaneseq
    %v436 = vshrl.u32 %v435, 7
    %v437 = vsub.s32 0, %v436
    %v438 = vrot.slane %v433, %v437
    %v456 = vunpack.c.l.b16 %v417
    %v457 = vunpack.c.l.b16 %v418
    %v458 = vunpack.c.l.b16 %v419
    %v459 = vunpack.c.l.b16 %v420
    %v460 = vunpack.c.l.b16 %v421
    %v461 = vunpack.c.l.b16 %v422
    %v462 = vunpack.c.l.b16 %v423
    %v463 = vunpack.c.l.b16 %v424
    %v464 = vunpack.c.l.b16 %v425
    %v465 = vunpack.c.l.b16 %v426
    %v466 = vunpack.c.l.b16 %v427
    %v467 = vunpack.c.l.b16 %v428
    %v468 = vunpack.c.l.b16 %v429
    %v469 = vunpack.c.l.b16 %v430
    %v470 = vunpack.c.l.b16 %v431
    %v471 = vunpack.c.l.b16 %v432
    %v472 = vpack.c.b16 %v457, %v456
    %v473 = vpack.c.b16 %v459, %v458
    %v474 = vpack.c.b16 %v461, %v460
    %v475 = vpack.c.b16 %v463, %v462
    %v476 = vpack.c.b16 %v465, %v464
    %v477 = vpack.c.b16 %v467, %v466
    %v478 = vpack.c.b16 %v469, %v468
    %v479 = vpack.c.b16 %v471, %v470
    %488 = vmatprep.subr.bf16.mxu0 0
    %489 = vmatpush1.bf16.msra.mxu0 %v472
    %490 = vmatprep.subr.bf16.mxu0 0
    %491 = vmatpush1.bf16.msra.mxu0 %v473
    %492 = vmatprep.subr.bf16.mxu0 0
    %493 = vmatpush1.bf16.msra.mxu0 %v474
    %494 = vmatprep.subr.bf16.mxu0 0
    %495 = vmatpush1.bf16.msra.mxu0 %v475
    %496 = vmatprep.subr.bf16.mxu0 0
    %497 = vmatpush1.bf16.msra.mxu0 %v476
    %498 = vmatprep.subr.bf16.mxu0 0
    %499 = vmatpush1.bf16.msra.mxu0 %v477
    %500 = vmatprep.subr.bf16.mxu0 0
    %501 = vmatpush1.bf16.msra.mxu0 %v478
    %502 = vmatprep.subr.bf16.mxu0 0
    %503 = vmatpush1.bf16.msra.mxu0 %v479
    %504 = vmatprep.subr.bf16.mxu0 0
    %505 = vmatpush1.bf16.msra.mxu0 0
    %506 = vmatprep.subr.bf16.mxu0 0
    %507 = vmatpush1.bf16.msra.mxu0 0
    %508 = vmatprep.subr.bf16.mxu0 0
    %509 = vmatpush1.bf16.msra.mxu0 0
    %510 = vmatprep.subr.bf16.mxu0 0
    %511 = vmatpush1.bf16.msra.mxu0 0
    %512 = vmatprep.subr.bf16.mxu0 0
    %513 = vmatpush1.bf16.msra.mxu0 0
    %514 = vmatprep.subr.bf16.mxu0 0
    %515 = vmatpush1.bf16.msra.mxu0 0
    %516 = vmatprep.subr.bf16.mxu0 0
    %517 = vmatpush1.bf16.msra.mxu0 0
    %518 = vmatprep.subr.bf16.mxu0 0
    %519 = vmatpush1.bf16.msra.mxu0 0
    %520 = vmatprep.mubr.bf16.mxu0 0
    %521 = vmatmul.mubr.bf16.gmra.mrb[0].mxu0 %v416
    %v522 = vpop.f32.mrb[0].mxu0
    %v523 = vadd.f32 %v438, %v522
    %v524 = vpop.f32.mrb[0].mxu0
    %v525 = vpop.f32.mrb[0].mxu0
    %v526 = vadd.f32 %v438, %v525
    %v527 = vpop.f32.mrb[0].mxu0
    %528 = vdwg.mxu0
    %529 = vst [vmem:[#allocation12] sm:$0x3] %v523
    %530 = vst [vmem:[#allocation13] sm:$0x3] %v526
    // Predicated region
    $region62: #{tpu_custom_call.1} parent=1 // pred_check
      _
    $region63: #{tpu_custom_call.1} parent=1 // pred_check_branch
      %532 = sbr.rel (0) target = $region65
    $region64: #{tpu_custom_call.1} parent=1 // pred_region
      %s534 = ssub.s32 32, 32
      %535 = vsyncadd [#allocation5], %s534
      %s537 = sshll.u32 [#allocation12], 4
      %s538 = int_to_ptr.vmem [resolvable:$true] %s537
      %540 = dma.vmem_to_hbm [thread:$0]  %s538, 32, %s10, [#allocation5]
    $region65: #{tpu_custom_call.1} parent=1 // pred_fallthru
      _
    // Predicated region
    $region66: #{tpu_custom_call.1} parent=1 // pred_check
      _
    $region67: #{tpu_custom_call.1} parent=1 // pred_check_branch
      %542 = sbr.rel (0) target = $region69
    $region68: #{tpu_custom_call.1} parent=1 // pred_region
      %s544 = ssub.s32 32, 32
      %545 = vsyncadd [#allocation14], %s544
      %s547 = sshll.u32 [#allocation13], 4
      %s548 = int_to_ptr.vmem [resolvable:$true] %s547
      %550 = dma.vmem_to_hbm [thread:$0]  %s548, 32, %s11, [#allocation14]
    $region69: #{tpu_custom_call.1} parent=1 // pred_fallthru
      _
    // Predicated region
    $region70: #{tpu_custom_call.1} parent=1 // pred_check
      _
    $region71: #{tpu_custom_call.1} parent=1 // pred_check_branch
      %552 = sbr.rel (0) target = $region73
    $region72: #{tpu_custom_call.1} parent=1 // pred_region
      %553 = dma.done [#allocation5], 32
    $region73: #{tpu_custom_call.1} parent=1 // pred_fallthru
      _
    // Predicated region
    $region74: #{tpu_custom_call.1} parent=1 // pred_check
      _
    $region75: #{tpu_custom_call.1} parent=1 // pred_check_branch
      %555 = sbr.rel (0) target = $region77
    $region76: #{tpu_custom_call.1} parent=1 // pred_region
      %556 = dma.done [#allocation14], 32
    $region77: #{tpu_custom_call.1} parent=1 // pred_fallthru
      _
    %557 = vsyncpa [#allocation4], 1
    %558 = vsyncpa [#allocation7], 1
    %559 = vsyncpa [#allocation10], 1
    %560 = vsyncpa [#allocation5], 1
    %561 = vsyncpa [#allocation14], 1

</llo_original>
